<compile_context>
chip_gen: v6e
topology: v6e:2x2x1
jax: 0.10.0
libtpu: 0.0.40
codegen_flags: <defaults>
</compile_context>

<pallas_src>
import jax
import jax.numpy as jnp
from jax.experimental import pallas as pl
from jax.experimental.pallas import tpu as pltpu

EPS = 1e-5
LANE = 128      # vreg lane width
SUBLANE = 8     # vreg sublane count (f32)
M_TILE = 256    # rows of the flattened [B*P_pad, Cin] slab per grid step


def _round_up(v, m):
    return ((v + m - 1) // m) * m


# -----------------------------------------------------------------------------
# Kernel: one MXU matmul (bf16 in, f32 acc) + f32 bias add per row tile.
# -----------------------------------------------------------------------------
def gcn_rowtile_kernel(g_ref, w_ref, bias_ref, out_ref):
    """out = G @ W' + bias for one [M_TILE, Cout_pad] row tile.

    g_ref    : [M_TILE, Cin]        bf16   (pool^T @ A_hat @ x, flattened rows)
    w_ref    : [Cin, Cout_pad]      bf16   BN-folded GCN weight (VMEM-resident)
    bias_ref : [M_TILE, Cout_pad]   f32    folded BN-shift + GCN-bias terms
    out_ref  : [M_TILE, Cout_pad]   f32    lane-dense output slab tile
    """
    acc = jnp.dot(g_ref[...], w_ref[...], preferred_element_type=jnp.float32)
    out_ref[...] = acc + bias_ref[...]


# -----------------------------------------------------------------------------
# One-time parameter preparation (model init, OUTSIDE the per-call hot path).
# -----------------------------------------------------------------------------
def prepare_params(gamma, beta, r_mean, r_var, w, b):
    """Fold BatchNorm(eval) into the GCN weight and pad to lane-dense shapes.

    Returns:
      w_pad       [Cin, Cout_pad]  bf16   W' = diag(gamma*rsqrt(var+eps)) @ W
      shift_w_pad [Cout_pad]       f32    (beta - mean*scale) @ W
      b_pad       [Cout_pad]       f32    GCNConv bias
    """
    c_in, c_out = w.shape
    c_out_pad = _round_up(c_out, LANE)

    scale = gamma.reshape(-1) * jax.lax.rsqrt(r_var.reshape(-1) + EPS)   # [Cin]
    shift = beta.reshape(-1) - r_mean.reshape(-1) * scale                # [Cin]
    w_fold = scale[:, None] * w                                          # [Cin, Cout]
    shift_w = shift @ w                                                  # [Cout]

    w_pad = jnp.pad(w_fold, ((0, 0), (0, c_out_pad - c_out))).astype(jnp.bfloat16)
    shift_w_pad = jnp.pad(shift_w, (0, c_out_pad - c_out)).astype(jnp.float32)
    b_pad = jnp.pad(b.reshape(-1), (0, c_out_pad - c_out)).astype(jnp.float32)
    return w_pad, shift_w_pad, b_pad


# -----------------------------------------------------------------------------
# Batched forward: B independent graphs, shared BN/GCN parameters.
# -----------------------------------------------------------------------------
def gcn_forward_batched(x, a_norm, pool_index, w_pad, shift_w_pad, b_pad,
                        out_channels):
    """x [B,N,Cin], a_norm [B,N,N], pool_index [B,N,P] -> [B, P, out_channels]."""
    B, N, c_in = x.shape
    P = pool_index.shape[-1]
    c_out_pad = w_pad.shape[1]
    p_pad = _round_up(P, SUBLANE)

    # ---- cheap batched wrapper glue (fused under jit) -----------------------
    # PA = pool^T @ A_hat,  G = PA @ x   (tiny contractions; never enter VMEM)
    pa = jnp.einsum("bnp,bnm->bpm", pool_index, a_norm,
                    preferred_element_type=jnp.float32)          # [B, P, N]
    g = jnp.einsum("bpn,bnc->bpc", pa, x,
                   preferred_element_type=jnp.float32)           # [B, P, Cin]
    # bias_out = rowsum(PA) * (shift @ W)  +  colsum(pool) * b
    bias = (pa.sum(-1)[..., None] * shift_w_pad
            + pool_index.sum(1)[..., None] * b_pad)              # [B, P, Cout_pad]

    # ---- pad P -> P_pad, flatten to a row slab, pad rows to M_TILE ----------
    g = jnp.pad(g, ((0, 0), (0, p_pad - P), (0, 0)))
    bias = jnp.pad(bias, ((0, 0), (0, p_pad - P), (0, 0)))
    rows = B * p_pad
    rows_pad = _round_up(rows, M_TILE)
    g_rows = jnp.pad(g.reshape(rows, c_in),
                     ((0, rows_pad - rows), (0, 0))).astype(jnp.bfloat16)
    bias_rows = jnp.pad(bias.reshape(rows, c_out_pad),
                        ((0, rows_pad - rows), (0, 0))).astype(jnp.float32)

    n_tiles = rows_pad // M_TILE
    cost = pl.CostEstimate(
        flops=2 * rows_pad * c_in * c_out_pad,
        transcendentals=0,
        bytes_accessed=(rows_pad * c_in * 2            # G (bf16)
                        + c_in * c_out_pad * 2         # W' (bf16, resident)
                        + rows_pad * c_out_pad * 4     # bias (f32)
                        + rows_pad * c_out_pad * 4))   # out (f32)

    out_rows = pl.pallas_call(
        gcn_rowtile_kernel,
        grid=(n_tiles,),
        in_specs=[
            pl.BlockSpec((M_TILE, c_in), lambda i: (i, 0)),        # G tile
            pl.BlockSpec((c_in, c_out_pad), lambda i: (0, 0)),     # W' resident
            pl.BlockSpec((M_TILE, c_out_pad), lambda i: (i, 0)),   # bias tile
        ],
        out_specs=pl.BlockSpec((M_TILE, c_out_pad), lambda i: (i, 0)),
        out_shape=jax.ShapeDtypeStruct((rows_pad, c_out_pad), jnp.float32),
        compiler_params=pltpu.CompilerParams(
            dimension_semantics=("parallel",),       # sharded across v7x cores
            vmem_limit_bytes=32 * 1024 * 1024,       # safe on v7x 64 MiB VMEM
        ),
        cost_estimate=cost,
    )(g_rows, w_pad, bias_rows)

    out = out_rows[:rows].reshape(B, p_pad, c_out_pad)
    return out[:, :P, :out_channels]


# -----------------------------------------------------------------------------
# Glue + reference
# -----------------------------------------------------------------------------
def gcn_norm_dense(edge_index, edge_weight, num_nodes):
    """PyG gcn_norm (add_self_loops=True, symmetric) as a dense matrix."""
    src, dst = edge_index[0], edge_index[1]
    a = jnp.zeros((num_nodes, num_nodes), jnp.float32)
    a = a.at[dst, src].add(edge_weight)              # message flows src -> dst
    a = a + jnp.eye(num_nodes, dtype=jnp.float32)    # self-loops, fill_value=1
    deg = a.sum(axis=1)
    d_inv_sqrt = jnp.where(deg > 0, 1.0 / jnp.sqrt(deg), 0.0)
    return d_inv_sqrt[:, None] * a * d_inv_sqrt[None, :]


def reference_forward(x, gamma, beta, r_mean, r_var, a_norm, w, b, pool_index):
    x_bn = (x - r_mean) * (gamma / jnp.sqrt(r_var + EPS)) + beta
    x1 = a_norm @ (x_bn @ w) + b
    return pool_index.T @ x1


if __name__ == "__main__":
    # Small per-graph shapes consistent with the module's forward; many graphs
    # batched onto the Pallas grid so the MXU sees real M.
    B = 256       # graphs per call  (-> 2048 rows -> 8 grid steps of 256)
    N = 16        # nodes per graph
    C_IN = 8      # in_channels
    C_OUT = 32    # out_channels
    P = 4         # pool_dim
    E = 2 * N     # ring graph, both directions

    key = jax.random.PRNGKey(0)
    kx, kw, kb, kg, kbeta, kmean, kvar, kew, kpool, kemb = jax.random.split(key, 10)

    # Batched inputs of the forward pass.
    x = jax.random.normal(kx, (B, N, C_IN), jnp.float32)
    src = jnp.arange(N, dtype=jnp.int32)
    dst = (src + 1) % N
    edge_index = jnp.stack([jnp.concatenate([src, dst]),
                            jnp.concatenate([dst, src])], axis=0)       # [2, E]
    edge_weight = jax.random.uniform(kew, (B, E), jnp.float32, 0.5, 1.5)
    pool_index = jax.random.uniform(kpool, (B, N, P), jnp.float32)
    emb_matrix = jax.random.normal(kemb, (P, C_OUT), jnp.float32)  # unused by forward

    # Shared parameters (BatchNorm1d + GCNConv weight/bias).
    gamma = 1.0 + 0.1 * jax.random.normal(kg, (1, C_IN), jnp.float32)
    beta = 0.1 * jax.random.normal(kbeta, (1, C_IN), jnp.float32)
    r_mean = 0.1 * jax.random.normal(kmean, (1, C_IN), jnp.float32)
    r_var = 1.0 + 0.1 * jax.random.uniform(kvar, (1, C_IN), jnp.float32)
    w = jax.random.normal(kw, (C_IN, C_OUT), jnp.float32) * (1.0 / jnp.sqrt(C_IN))
    b = 0.01 * jax.random.normal(kb, (1, C_OUT), jnp.float32)

    # Sparse edges -> dense symmetric-normalized adjacency, per graph.
    a_norm = jax.vmap(gcn_norm_dense, in_axes=(None, 0, None))(
        edge_index, edge_weight, N)                                    # [B, N, N]

    # One-time fold/pad of the weights (hoisted out of the per-call path).
    w_pad, shift_w_pad, b_pad = prepare_params(gamma, beta, r_mean, r_var, w, b)
    w_pad, shift_w_pad, b_pad = jax.block_until_ready((w_pad, shift_w_pad, b_pad))

    fwd = jax.jit(gcn_forward_batched, static_argnames=("out_channels",))
    out = fwd(x, a_norm, pool_index, w_pad, shift_w_pad, b_pad, out_channels=C_OUT)
    out = jax.block_until_ready(out)

    ref = jax.vmap(reference_forward,
                   in_axes=(0, None, None, None, None, 0, None, None, 0))(
        x, gamma, beta, r_mean, r_var, a_norm, w, b, pool_index)

    assert out.shape == (B, P, C_OUT)
    # bf16 MXU inputs -> slightly looser tolerance than the pure-f32 version.
    assert jnp.allclose(out, ref, atol=5e-2, rtol=2e-2)

    print("KERNEL_OK")
</pallas_src>

<mosaic_0001>
module attributes {stable_mosaic.version = 11 : i64} {
  func.func @gcn_rowtile_kernel(%arg0: i32, %arg1: memref<256x8xbf16, #tpu.memory_space<vmem>>, %arg2: memref<8x128xbf16, #tpu.memory_space<vmem>>, %arg3: memref<256x128xf32, #tpu.memory_space<vmem>>, %arg4: memref<256x128xf32, #tpu.memory_space<vmem>>) attributes {dimension_semantics = [#tpu.dimension_semantics<parallel>], iteration_bounds = array<i64: 8>, scalar_prefetch = 0 : i64, scratch_operands = 0 : i64, tpu.core_type = #tpu.core_type<tc>, window_params = [{transform_indices = @transform_0, window_bounds = array<i64: 256, 8>}, {pipeline_mode = #tpu.pipeline_mode<synchronous>, transform_indices = @transform_1, window_bounds = array<i64: 8, 128>}, {transform_indices = @transform_2, window_bounds = array<i64: 256, 128>}, {transform_indices = @transform_3, window_bounds = array<i64: 256, 128>}]} {
    %c0 = arith.constant 0 : index
    %c0_0 = arith.constant 0 : index
    %0 = vector.load %arg1[%c0, %c0_0] : memref<256x8xbf16, #tpu.memory_space<vmem>>, vector<256x8xbf16>
    %c0_1 = arith.constant 0 : index
    %c0_2 = arith.constant 0 : index
    %1 = vector.load %arg2[%c0_1, %c0_2] : memref<8x128xbf16, #tpu.memory_space<vmem>>, vector<8x128xbf16>
    %cst = arith.constant dense<0.000000e+00> : vector<256x128xf32>
    %2 = tpu.matmul %0, %1, %cst {dimension_numbers = #tpu.dot_dimension_numbers<[1], [0], [0], [1], [0, 0, 1, 1], [], []>} : vector<256x8xbf16>, vector<8x128xbf16>, vector<256x128xf32> -> vector<256x128xf32>
    %c0_3 = arith.constant 0 : index
    %c0_4 = arith.constant 0 : index
    %3 = vector.load %arg3[%c0_3, %c0_4] : memref<256x128xf32, #tpu.memory_space<vmem>>, vector<256x128xf32>
    %4 = arith.addf %2, %3 : vector<256x128xf32>
    %c0_5 = arith.constant 0 : index
    %c0_6 = arith.constant 0 : index
    %5 = vector.load %arg4[%c0_5, %c0_6] : memref<256x128xf32, #tpu.memory_space<vmem>>, vector<256x128xf32>
    tpu.vector_store %arg4[%c0_5, %c0_6], %4 {strides = array<i32>} : memref<256x128xf32, #tpu.memory_space<vmem>>, vector<256x128xf32>,
    return
  }
  func.func @transform_0(%arg0: i32) -> (i32, i32) {
    %c0_i32 = arith.constant 0 : i32
    %c0_i32_0 = arith.constant 0 : i32
    return %arg0, %c0_i32 : i32, i32
  }
  func.func @transform_1(%arg0: i32) -> (i32, i32) {
    %c0_i32 = arith.constant 0 : i32
    %c0_i32_0 = arith.constant 0 : i32
    %c0_i32_1 = arith.constant 0 : i32
    return %c0_i32, %c0_i32_0 : i32, i32
  }
  func.func @transform_2(%arg0: i32) -> (i32, i32) {
    %c0_i32 = arith.constant 0 : i32
    %c0_i32_0 = arith.constant 0 : i32
    return %arg0, %c0_i32 : i32, i32
  }
  func.func @transform_3(%arg0: i32) -> (i32, i32) {
    %c0_i32 = arith.constant 0 : i32
    %c0_i32_0 = arith.constant 0 : i32
    return %arg0, %c0_i32 : i32, i32
  }
}

</mosaic_0001>

<llo_original>
// kernel: gcn_forward_batched.1
$region0: #{gcn_forward_batched.1}
  #allocation0 [shape = 'u32[]', space=smem, size = 0x4, offset = 0x4, fixed_abs, tag = 'smem constant byte address 0x4 - core index']
  #allocation1 [shape = 'u32[144,128]{1,0:T(1,128)}', space=vmem, size = 0x12000, scoped, tag = 'internal scratch']
  %s0 = inlined_call_operand.vmem [shape: bf16[2048,8], index: 0, kind: input, shape index: {}]
  %s1 = inlined_call_operand.vmem [shape: bf16[8,128], index: 1, kind: input, shape index: {}]
  %s2 = inlined_call_operand.vmem [shape: f32[2048,128], index: 2, kind: input, shape index: {}]
  %s3 = inlined_call_operand.vmem [shape: f32[2048,128], index: 3, kind: output, shape index: {}]
  %s4 = sld [smem:[#allocation0]]
  $region45: #{gcn_forward_batched.1} parent=0
    _
  %s6 = ssub.s32 1, %s4
  %s7 = scalar_select 0, %s6, %s4
  loop: start=0, step=1, limit=10
  $region2: #{gcn_forward_batched.1} parent=0 // loop_pre_header
    _
  $region3: #{gcn_forward_batched.1} parent=0 // loop_header
    %s9 = sphi 0, %s13
    %p10 = scmp.ge.s32.totalorder %s9, 10
    %s19 = sphi 0, %s21
    %s22 = sphi 0, %s19
    %s23 = sphi 0, %s22
    %s39 = sphi 0, %s23
    %s43 = sphi 0, %s43
    %s45 = sphi 0, %s43
    %s46 = sphi 0, %s45
    %s60 = sphi 0, %s46
    %s66 = sphi 0, %s68
    %s69 = sphi 0, %s66
    %s70 = sphi 0, %s69
    %s86 = sphi 0, %s70
    %s92 = sphi 0, %s94
    %s95 = sphi 0, %s92
    %s96 = sphi 0, %s95
    %s112 = sphi 0, %s96
  $region4: #{gcn_forward_batched.1} parent=0 // loop_header_branch
    %12 = sbr.rel (%p10) target = $region8
  $region5: #{gcn_forward_batched.1} parent=0 // loop_body
    %s14 = ssub.s32 %s9, 1
    %s15 = ssub.s32 %s9, 2
    %s16 = sadd.s32 %s9, 1
    %s17 = ssub.s32 %s9, %s16
    %p18 = scmp.eq.s32.totalorder %s17, 0
    %s20 = sadd.s32 %s19, 1
    %s21 = scalar_select %p18, %s19, %s20
    %p24 = pneg %p18
    %p25 = scmp.eq.s32.totalorder %s9, 7
    %p26 = por %p24, %p25
    %p27 = scmp.ne.s32.totalorder %s19, %s22
    %p28 = scmp.eq.s32.totalorder %s9, 0
    %p29 = por %p27, %p28
    %p30 = scmp.ne.s32.totalorder %s19, %s22
    %p31 = scmp.eq.s32.totalorder %s14, 7
    %p32 = por %p30, %p31
    %p33 = scmp.ne.s32.totalorder %s22, %s23
    %p34 = scmp.eq.s32.totalorder %s14, 0
    %p35 = por %p33, %p34
    %p36 = scmp.ne.s32.totalorder %s22, %s23
    %p37 = scmp.eq.s32.totalorder %s15, 7
    %p38 = por %p36, %p37
    %p40 = scmp.ne.s32.totalorder %s23, %s39
    %p41 = scmp.eq.s32.totalorder %s15, 0
    %p42 = por %p40, %p41
    %s44 = sadd.s32 %s43, 1
    %p47 = scmp.eq.s32.totalorder %s9, 7
    %p48 = scmp.ne.s32.totalorder %s43, %s45
    %p49 = scmp.eq.s32.totalorder %s9, 0
    %p50 = por %p48, %p49
    %p51 = scmp.ne.s32.totalorder %s43, %s45
    %p52 = scmp.eq.s32.totalorder %s14, 7
    %p53 = por %p51, %p52
    %p54 = scmp.ne.s32.totalorder %s45, %s46
    %p55 = scmp.eq.s32.totalorder %s14, 0
    %p56 = por %p54, %p55
    %p57 = scmp.ne.s32.totalorder %s45, %s46
    %p58 = scmp.eq.s32.totalorder %s15, 7
    %p59 = por %p57, %p58
    %p61 = scmp.ne.s32.totalorder %s46, %s60
    %p62 = scmp.eq.s32.totalorder %s15, 0
    %p63 = por %p61, %p62
    %s64 = ssub.s32 %s9, %s16
    %p65 = scmp.eq.s32.totalorder %s64, 0
    %s67 = sadd.s32 %s66, 1
    %s68 = scalar_select %p65, %s66, %s67
    %p71 = pneg %p65
    %p72 = scmp.eq.s32.totalorder %s9, 7
    %p73 = por %p71, %p72
    %p74 = scmp.ne.s32.totalorder %s66, %s69
    %p75 = scmp.eq.s32.totalorder %s9, 0
    %p76 = por %p74, %p75
    %p77 = scmp.ne.s32.totalorder %s66, %s69
    %p78 = scmp.eq.s32.totalorder %s14, 7
    %p79 = por %p77, %p78
    %p80 = scmp.ne.s32.totalorder %s69, %s70
    %p81 = scmp.eq.s32.totalorder %s14, 0
    %p82 = por %p80, %p81
    %p83 = scmp.ne.s32.totalorder %s69, %s70
    %p84 = scmp.eq.s32.totalorder %s15, 7
    %p85 = por %p83, %p84
    %p87 = scmp.ne.s32.totalorder %s70, %s86
    %p88 = scmp.eq.s32.totalorder %s15, 0
    %p89 = por %p87, %p88
    %s90 = ssub.s32 %s9, %s16
    %p91 = scmp.eq.s32.totalorder %s90, 0
    %s93 = sadd.s32 %s92, 1
    %s94 = scalar_select %p91, %s92, %s93
    %p97 = pneg %p91
    %p98 = scmp.eq.s32.totalorder %s9, 7
    %p99 = por %p97, %p98
    %p100 = scmp.ne.s32.totalorder %s92, %s95
    %p101 = scmp.eq.s32.totalorder %s9, 0
    %p102 = por %p100, %p101
    %p103 = scmp.ne.s32.totalorder %s92, %s95
    %p104 = scmp.eq.s32.totalorder %s14, 7
    %p105 = por %p103, %p104
    %p106 = scmp.ne.s32.totalorder %s95, %s96
    %p107 = scmp.eq.s32.totalorder %s14, 0
    %p108 = por %p106, %p107
    %p109 = scmp.ne.s32.totalorder %s95, %s96
    %p110 = scmp.eq.s32.totalorder %s15, 7
    %p111 = por %p109, %p110
    %p113 = scmp.ne.s32.totalorder %s96, %s112
    %p114 = scmp.eq.s32.totalorder %s15, 0
    %p115 = por %p113, %p114
    %p116 = scmp.le.s32.totalorder 1, %s9
    %p117 = scmp.lt.s32.totalorder %s9, 9
    %p118 = pnand %p116, %p117
    %p119 = pneg %p118
    // Predicated region
    $region9: #{gcn_forward_batched.1} parent=5 // pred_check
      _
    $region10: #{gcn_forward_batched.1} parent=5 // pred_check_branch
      %121 = sbr.rel (%p118) target = $region12
    $region11: #{gcn_forward_batched.1} parent=5 // pred_region
      %s122 = ssub.s32 %s9, 1
      // Predicated region
      $region13: #{gcn_forward_batched.1} parent=11 // pred_check
        %p123 = pneg %p56
      $region14: #{gcn_forward_batched.1} parent=11 // pred_check_branch
        %125 = sbr.rel (%p123) target = $region16
      $region15: #{gcn_forward_batched.1} parent=11 // pred_region
        _
      $region16: #{gcn_forward_batched.1} parent=11 // pred_fallthru
        _
    $region12: #{gcn_forward_batched.1} parent=5 // pred_fallthru
      _
    %p126 = scmp.lt.s32.totalorder %s9, 8
    // Predicated region
    $region17: #{gcn_forward_batched.1} parent=5 // pred_check
      %p127 = pneg %p126
    $region18: #{gcn_forward_batched.1} parent=5 // pred_check_branch
      %129 = sbr.rel (%p127) target = $region20
    $region19: #{gcn_forward_batched.1} parent=5 // pred_region
      // Predicated region
      $region21: #{gcn_forward_batched.1} parent=19 // pred_check
        %p130 = pneg %p29
      $region22: #{gcn_forward_batched.1} parent=19 // pred_check_branch
        %132 = sbr.rel (%p130) target = $region24
      $region23: #{gcn_forward_batched.1} parent=19 // pred_region
        %s133 = smul.u32 32, %s9
        %p134 = scmp.lt.s32.totalorder %s133, 255
        %s135 = scalar_select %p134, %s133, 255
        %s136 = smul.addr %s135, 4
        %s137 = scalar_lea.vmem %s0, %s136
        %s138 = smul.u32 32, %s9
      $region24: #{gcn_forward_batched.1} parent=19 // pred_fallthru
        _
      // Predicated region
      $region25: #{gcn_forward_batched.1} parent=19 // pred_check
        %p139 = pneg %p76
      $region26: #{gcn_forward_batched.1} parent=19 // pred_check_branch
        %141 = sbr.rel (%p139) target = $region28
      $region27: #{gcn_forward_batched.1} parent=19 // pred_region
        %s142 = smul.u32 32, %s9
        %p143 = scmp.lt.s32.totalorder %s142, 255
        %s144 = scalar_select %p143, %s142, 255
        %s145 = smul.addr %s144, 8
        %s146 = scalar_lea.vmem %s2, %s145
        %s147 = smul.u32 32, %s9
      $region28: #{gcn_forward_batched.1} parent=19 // pred_fallthru
        _
    $region20: #{gcn_forward_batched.1} parent=5 // pred_fallthru
      _
    %p148 = scmp.le.s32.totalorder 1, %s9
    %p149 = scmp.lt.s32.totalorder %s9, 9
    %p150 = pnand %p148, %p149
    %p151 = pneg %p150
    // Predicated region
    $region29: #{gcn_forward_batched.1} parent=5 // pred_check
      _
    $region30: #{gcn_forward_batched.1} parent=5 // pred_check_branch
      %153 = sbr.rel (%p150) target = $region32
    $region31: #{gcn_forward_batched.1} parent=5 // pred_region
      %s154 = ssub.s32 %s9, 1
      %s155 = smul.u32 32, %s14
      %p156 = scmp.lt.s32.totalorder %s155, 255
      %s157 = scalar_select %p156, %s155, 255
      %s158 = smul.addr %s157, 4
      %s159 = scalar_lea.vmem %s0, %s158
      %p160 = pneg %p35
      %p161 = pneg %p32
      %p162 = pneg %p56
      %p163 = pneg %p53
      %s164 = smul.u32 32, %s14
      %p165 = scmp.lt.s32.totalorder %s164, 255
      %s166 = scalar_select %p165, %s164, 255
      %s167 = smul.addr %s166, 8
      %s168 = scalar_lea.vmem %s2, %s167
      %p169 = pneg %p82
      %p170 = pneg %p79
      %p171 = pneg %p108
      %p172 = pneg %p105
      %s173 = smul.u32 32, %s14
      %p174 = scmp.lt.s32.totalorder %s173, 255
      %s175 = scalar_select %p174, %s173, 255
      %s176 = smul.addr %s175, 8
      %s177 = scalar_lea.vmem %s3, %s176
      %s178 = smul.u32 32, %s14
      %p179 = scmp.lt.s32.totalorder %s178, 255
      %s180 = scalar_select %p179, %s178, 255
      %s181 = smul.addr %s180, 4
      %s182 = scalar_lea.vmem %s0, %s181
      %s183 = smul.u32 32, %s14
      %s184 = smul.u32 32, %s14
      %p185 = scmp.lt.s32.totalorder %s184, 255
      %s186 = scalar_select %p185, %s184, 255
      %s187 = smul.addr %s186, 8
      %s188 = scalar_lea.vmem %s2, %s187
      %s189 = smul.u32 32, %s14
      %s190 = smul.u32 32, %s14
      %p191 = scmp.lt.s32.totalorder %s190, 255
      %s192 = scalar_select %p191, %s190, 255
      %s193 = smul.addr %s192, 8
      %s194 = scalar_lea.vmem %s3, %s193
      %s195 = smul.u32 32, %s14
      %v197 = vld [vmem:[%s182] sm:$0xf]
      %v198 = vld [vmem:[%s182 + $0x4] sm:$0xf]
      %v199 = vld [vmem:[%s182 + $0x8] sm:$0xf]
      %v200 = vld [vmem:[%s182 + $0xc] sm:$0xf]
      %v201 = vld [vmem:[%s182 + $0x10] sm:$0xf]
      %v202 = vld [vmem:[%s182 + $0x14] sm:$0xf]
      %v203 = vld [vmem:[%s182 + $0x18] sm:$0xf]
      %v204 = vld [vmem:[%s182 + $0x1c] sm:$0xf]
      %v205 = vld [vmem:[%s182 + $0x20] sm:$0xf]
      %v206 = vld [vmem:[%s182 + $0x24] sm:$0xf]
      %v207 = vld [vmem:[%s182 + $0x28] sm:$0xf]
      %v208 = vld [vmem:[%s182 + $0x2c] sm:$0xf]
      %v209 = vld [vmem:[%s182 + $0x30] sm:$0xf]
      %v210 = vld [vmem:[%s182 + $0x34] sm:$0xf]
      %v211 = vld [vmem:[%s182 + $0x38] sm:$0xf]
      %v212 = vld [vmem:[%s182 + $0x3c] sm:$0xf]
      %v213 = vld [vmem:[%s182 + $0x40] sm:$0xf]
      %v214 = vld [vmem:[%s182 + $0x44] sm:$0xf]
      %v215 = vld [vmem:[%s182 + $0x48] sm:$0xf]
      %v216 = vld [vmem:[%s182 + $0x4c] sm:$0xf]
      %v217 = vld [vmem:[%s182 + $0x50] sm:$0xf]
      %v218 = vld [vmem:[%s182 + $0x54] sm:$0xf]
      %v219 = vld [vmem:[%s182 + $0x58] sm:$0xf]
      %v220 = vld [vmem:[%s182 + $0x5c] sm:$0xf]
      %v221 = vld [vmem:[%s182 + $0x60] sm:$0xf]
      %v222 = vld [vmem:[%s182 + $0x64] sm:$0xf]
      %v223 = vld [vmem:[%s182 + $0x68] sm:$0xf]
      %v224 = vld [vmem:[%s182 + $0x6c] sm:$0xf]
      %v225 = vld [vmem:[%s182 + $0x70] sm:$0xf]
      %v226 = vld [vmem:[%s182 + $0x74] sm:$0xf]
      %v227 = vld [vmem:[%s182 + $0x78] sm:$0xf]
      %v228 = vld [vmem:[%s182 + $0x7c] sm:$0xf]
      %v229 = vld [vmem:[%s1] sm:$0xf]
      %v230 = vld [vmem:[%s188] sm:$0xff]
      %v231 = vld [vmem:[%s188 + $0x8] sm:$0xff]
      %v232 = vld [vmem:[%s188 + $0x10] sm:$0xff]
      %v233 = vld [vmem:[%s188 + $0x18] sm:$0xff]
      %v234 = vld [vmem:[%s188 + $0x20] sm:$0xff]
      %v235 = vld [vmem:[%s188 + $0x28] sm:$0xff]
      %v236 = vld [vmem:[%s188 + $0x30] sm:$0xff]
      %v237 = vld [vmem:[%s188 + $0x38] sm:$0xff]
      %v238 = vld [vmem:[%s188 + $0x40] sm:$0xff]
      %v239 = vld [vmem:[%s188 + $0x48] sm:$0xff]
      %v240 = vld [vmem:[%s188 + $0x50] sm:$0xff]
      %v241 = vld [vmem:[%s188 + $0x58] sm:$0xff]
      %v242 = vld [vmem:[%s188 + $0x60] sm:$0xff]
      %v243 = vld [vmem:[%s188 + $0x68] sm:$0xff]
      %v244 = vld [vmem:[%s188 + $0x70] sm:$0xff]
      %v245 = vld [vmem:[%s188 + $0x78] sm:$0xff]
      %v246 = vld [vmem:[%s188 + $0x80] sm:$0xff]
      %v247 = vld [vmem:[%s188 + $0x88] sm:$0xff]
      %v248 = vld [vmem:[%s188 + $0x90] sm:$0xff]
      %v249 = vld [vmem:[%s188 + $0x98] sm:$0xff]
      %v250 = vld [vmem:[%s188 + $0xa0] sm:$0xff]
      %v251 = vld [vmem:[%s188 + $0xa8] sm:$0xff]
      %v252 = vld [vmem:[%s188 + $0xb0] sm:$0xff]
      %v253 = vld [vmem:[%s188 + $0xb8] sm:$0xff]
      %v254 = vld [vmem:[%s188 + $0xc0] sm:$0xff]
      %v255 = vld [vmem:[%s188 + $0xc8] sm:$0xff]
      %v256 = vld [vmem:[%s188 + $0xd0] sm:$0xff]
      %v257 = vld [vmem:[%s188 + $0xd8] sm:$0xff]
      %v258 = vld [vmem:[%s188 + $0xe0] sm:$0xff]
      %v259 = vld [vmem:[%s188 + $0xe8] sm:$0xff]
      %v260 = vld [vmem:[%s188 + $0xf0] sm:$0xff]
      %v261 = vld [vmem:[%s188 + $0xf8] sm:$0xff]
      %v294 = vunpack.c.l.b16 %v197
      %v295 = vunpack.c.l.b16 %v198
      %v296 = vunpack.c.l.b16 %v199
      %v297 = vunpack.c.l.b16 %v200
      %v298 = vunpack.c.l.b16 %v201
      %v299 = vunpack.c.l.b16 %v202
      %v300 = vunpack.c.l.b16 %v203
      %v301 = vunpack.c.l.b16 %v204
      %v302 = vunpack.c.l.b16 %v205
      %v303 = vunpack.c.l.b16 %v206
      %v304 = vunpack.c.l.b16 %v207
      %v305 = vunpack.c.l.b16 %v208
      %v306 = vunpack.c.l.b16 %v209
      %v307 = vunpack.c.l.b16 %v210
      %v308 = vunpack.c.l.b16 %v211
      %v309 = vunpack.c.l.b16 %v212
      %v310 = vunpack.c.l.b16 %v213
      %v311 = vunpack.c.l.b16 %v214
      %v312 = vunpack.c.l.b16 %v215
      %v313 = vunpack.c.l.b16 %v216
      %v314 = vunpack.c.l.b16 %v217
      %v315 = vunpack.c.l.b16 %v218
      %v316 = vunpack.c.l.b16 %v219
      %v317 = vunpack.c.l.b16 %v220
      %v318 = vunpack.c.l.b16 %v221
      %v319 = vunpack.c.l.b16 %v222
      %v320 = vunpack.c.l.b16 %v223
      %v321 = vunpack.c.l.b16 %v224
      %v322 = vunpack.c.l.b16 %v225
      %v323 = vunpack.c.l.b16 %v226
      %v324 = vunpack.c.l.b16 %v227
      %v325 = vunpack.c.l.b16 %v228
      %v326 = vpack.c.b16 %v295, %v294
      %v327 = vpack.c.b16 %v297, %v296
      %v328 = vpack.c.b16 %v299, %v298
      %v329 = vpack.c.b16 %v301, %v300
      %v330 = vpack.c.b16 %v303, %v302
      %v331 = vpack.c.b16 %v305, %v304
      %v332 = vpack.c.b16 %v307, %v306
      %v333 = vpack.c.b16 %v309, %v308
      %v334 = vpack.c.b16 %v311, %v310
      %v335 = vpack.c.b16 %v313, %v312
      %v336 = vpack.c.b16 %v315, %v314
      %v337 = vpack.c.b16 %v317, %v316
      %v338 = vpack.c.b16 %v319, %v318
      %v339 = vpack.c.b16 %v321, %v320
      %v340 = vpack.c.b16 %v323, %v322
      %v341 = vpack.c.b16 %v325, %v324
      %vm342 = vcmask 64512
      %v344 = vsel %vm342, %v326, 0
      %v347 = vsel %vm342, %v327, 0
      %v350 = vsel %vm342, %v328, 0
      %v353 = vsel %vm342, %v329, 0
      %v356 = vsel %vm342, %v330, 0
      %v359 = vsel %vm342, %v331, 0
      %v362 = vsel %vm342, %v332, 0
      %v365 = vsel %vm342, %v333, 0
      %v368 = vsel %vm342, %v334, 0
      %v371 = vsel %vm342, %v335, 0
      %v374 = vsel %vm342, %v336, 0
      %v377 = vsel %vm342, %v337, 0
      %v380 = vsel %vm342, %v338, 0
      %v383 = vsel %vm342, %v339, 0
      %v386 = vsel %vm342, %v340, 0
      %v389 = vsel %vm342, %v341, 0
      %vm391 = vcmask 1043456
      %v393 = vsel %vm391, %v229, 0
      %395 = vmatprep.subr.bf16.mxu0 0
      %396 = vmatpush1.bf16.msra.mxu0 0
      %397 = vmatprep.subr.bf16.mxu0 0
      %398 = vmatpush1.bf16.msra.mxu0 0
      %399 = vmatprep.subr.bf16.mxu0 0
      %400 = vmatpush1.bf16.msra.mxu0 0
      %401 = vmatprep.subr.bf16.mxu0 0
      %402 = vmatpush1.bf16.msra.mxu0 0
      %403 = vmatprep.subr.bf16.mxu0 0
      %404 = vmatpush1.bf16.msra.mxu0 0
      %405 = vmatprep.subr.bf16.mxu0 0
      %406 = vmatpush1.bf16.msra.mxu0 0
      %407 = vmatprep.subr.bf16.mxu0 0
      %408 = vmatpush1.bf16.msra.mxu0 0
      %409 = vmatprep.subr.bf16.mxu0 0
      %410 = vmatpush1.bf16.msra.mxu0 %v393
      %411 = vmatprep.subr.bf16.mxu0 0
      %412 = vmatpush2.bf16.msra.mxu0 0
      %413 = vmatprep.subr.bf16.mxu0 0
      %414 = vmatpush2.bf16.msra.mxu0 0
      %415 = vmatprep.subr.bf16.mxu0 0
      %416 = vmatpush2.bf16.msra.mxu0 0
      %417 = vmatprep.subr.bf16.mxu0 0
      %418 = vmatpush2.bf16.msra.mxu0 0
      %419 = vmatprep.subr.bf16.mxu0 0
      %420 = vmatpush2.bf16.msra.mxu0 0
      %421 = vmatprep.subr.bf16.mxu0 0
      %422 = vmatpush2.bf16.msra.mxu0 0
      %423 = vmatprep.subr.bf16.mxu0 0
      %424 = vmatpush2.bf16.msra.mxu0 0
      %425 = vmatprep.subr.bf16.mxu0 0
      %426 = vmatpush2.bf16.msra.mxu0 0
      %427 = vmatprep.mubr.bf16.mxu0 0
      %428 = vmatmul.mubr.bf16.gmra.mxu0 %v344
      %v429 = vpop.f32.mrf.mxu0
      %v430 = vadd.f32 %v230, %v429
      %v431 = vpop.f32.mrf.mxu0
      %v432 = vpop.f32.mrf.mxu0
      %v433 = vadd.f32 %v231, %v432
      %v434 = vpop.f32.mrf.mxu0
      %435 = vmatprep.mubr.bf16.mxu0 0
      %436 = vmatmul.mubr.bf16.gmra.mxu0 %v347
      %v437 = vpop.f32.mrf.mxu0
      %v438 = vadd.f32 %v232, %v437
      %v439 = vpop.f32.mrf.mxu0
      %v440 = vpop.f32.mrf.mxu0
      %v441 = vadd.f32 %v233, %v440
      %v442 = vpop.f32.mrf.mxu0
      %443 = vmatprep.mubr.bf16.mxu0 0
      %444 = vmatmul.mubr.bf16.gmra.mxu0 %v350
      %v445 = vpop.f32.mrf.mxu0
      %v446 = vadd.f32 %v234, %v445
      %v447 = vpop.f32.mrf.mxu0
      %v448 = vpop.f32.mrf.mxu0
      %v449 = vadd.f32 %v235, %v448
      %v450 = vpop.f32.mrf.mxu0
      %451 = vmatprep.mubr.bf16.mxu0 0
      %452 = vmatmul.mubr.bf16.gmra.mxu0 %v353
      %v453 = vpop.f32.mrf.mxu0
      %v454 = vadd.f32 %v236, %v453
      %v455 = vpop.f32.mrf.mxu0
      %v456 = vpop.f32.mrf.mxu0
      %v457 = vadd.f32 %v237, %v456
      %v458 = vpop.f32.mrf.mxu0
      %459 = vmatprep.mubr.bf16.mxu0 0
      %460 = vmatmul.mubr.bf16.gmra.mxu0 %v356
      %v461 = vpop.f32.mrf.mxu0
      %v462 = vadd.f32 %v238, %v461
      %v463 = vpop.f32.mrf.mxu0
      %v464 = vpop.f32.mrf.mxu0
      %v465 = vadd.f32 %v239, %v464
      %v466 = vpop.f32.mrf.mxu0
      %467 = vmatprep.mubr.bf16.mxu0 0
      %468 = vmatmul.mubr.bf16.gmra.mxu0 %v359
      %v469 = vpop.f32.mrf.mxu0
      %v470 = vadd.f32 %v240, %v469
      %v471 = vpop.f32.mrf.mxu0
      %v472 = vpop.f32.mrf.mxu0
      %v473 = vadd.f32 %v241, %v472
      %v474 = vpop.f32.mrf.mxu0
      %475 = vmatprep.mubr.bf16.mxu0 0
      %476 = vmatmul.mubr.bf16.gmra.mxu0 %v362
      %v477 = vpop.f32.mrf.mxu0
      %v478 = vadd.f32 %v242, %v477
      %v479 = vpop.f32.mrf.mxu0
      %v480 = vpop.f32.mrf.mxu0
      %v481 = vadd.f32 %v243, %v480
      %v482 = vpop.f32.mrf.mxu0
      %483 = vmatprep.mubr.bf16.mxu0 0
      %484 = vmatmul.mubr.bf16.gmra.mxu0 %v365
      %v485 = vpop.f32.mrf.mxu0
      %v486 = vadd.f32 %v244, %v485
      %v487 = vpop.f32.mrf.mxu0
      %v488 = vpop.f32.mrf.mxu0
      %v489 = vadd.f32 %v245, %v488
      %v490 = vpop.f32.mrf.mxu0
      %491 = vmatprep.mubr.bf16.mxu0 0
      %492 = vmatmul.mubr.bf16.gmra.mxu0 %v368
      %v493 = vpop.f32.mrf.mxu0
      %v494 = vadd.f32 %v246, %v493
      %v495 = vpop.f32.mrf.mxu0
      %v496 = vpop.f32.mrf.mxu0
      %v497 = vadd.f32 %v247, %v496
      %v498 = vpop.f32.mrf.mxu0
      %499 = vmatprep.mubr.bf16.mxu0 0
      %500 = vmatmul.mubr.bf16.gmra.mxu0 %v371
      %v501 = vpop.f32.mrf.mxu0
      %v502 = vadd.f32 %v248, %v501
      %v503 = vpop.f32.mrf.mxu0
      %v504 = vpop.f32.mrf.mxu0
      %v505 = vadd.f32 %v249, %v504
      %v506 = vpop.f32.mrf.mxu0
      %507 = vmatprep.mubr.bf16.mxu0 0
      %508 = vmatmul.mubr.bf16.gmra.mxu0 %v374
      %v509 = vpop.f32.mrf.mxu0
      %v510 = vadd.f32 %v250, %v509
      %v511 = vpop.f32.mrf.mxu0
      %v512 = vpop.f32.mrf.mxu0
      %v513 = vadd.f32 %v251, %v512
      %v514 = vpop.f32.mrf.mxu0
      %515 = vmatprep.mubr.bf16.mxu0 0
      %516 = vmatmul.mubr.bf16.gmra.mxu0 %v377
      %v517 = vpop.f32.mrf.mxu0
      %v518 = vadd.f32 %v252, %v517
      %v519 = vpop.f32.mrf.mxu0
      %v520 = vpop.f32.mrf.mxu0
      %v521 = vadd.f32 %v253, %v520
      %v522 = vpop.f32.mrf.mxu0
      %523 = vmatprep.mubr.bf16.mxu0 0
      %524 = vmatmul.mubr.bf16.gmra.mxu0 %v380
      %v525 = vpop.f32.mrf.mxu0
      %v526 = vadd.f32 %v254, %v525
      %v527 = vpop.f32.mrf.mxu0
      %v528 = vpop.f32.mrf.mxu0
      %v529 = vadd.f32 %v255, %v528
      %v530 = vpop.f32.mrf.mxu0
      %531 = vmatprep.mubr.bf16.mxu0 0
      %532 = vmatmul.mubr.bf16.gmra.mxu0 %v383
      %v533 = vpop.f32.mrf.mxu0
      %v534 = vadd.f32 %v256, %v533
      %v535 = vpop.f32.mrf.mxu0
      %v536 = vpop.f32.mrf.mxu0
      %v537 = vadd.f32 %v257, %v536
      %v538 = vpop.f32.mrf.mxu0
      %539 = vmatprep.mubr.bf16.mxu0 0
      %540 = vmatmul.mubr.bf16.gmra.mxu0 %v386
      %v541 = vpop.f32.mrf.mxu0
      %v542 = vadd.f32 %v258, %v541
      %v543 = vpop.f32.mrf.mxu0
      %v544 = vpop.f32.mrf.mxu0
      %v545 = vadd.f32 %v259, %v544
      %v546 = vpop.f32.mrf.mxu0
      %547 = vmatprep.mubr.bf16.mxu0 0
      %548 = vmatmul.mubr.bf16.gmra.mxu0 %v389
      %v549 = vpop.f32.mrf.mxu0
      %v550 = vadd.f32 %v260, %v549
      %v551 = vpop.f32.mrf.mxu0
      %v552 = vpop.f32.mrf.mxu0
      %v553 = vadd.f32 %v261, %v552
      %v554 = vpop.f32.mrf.mxu0
      %555 = vdwg.mxu0
      %556 = vst [vmem:[%s194] sm:$0xff] %v430
      %557 = vst [vmem:[%s194 + $0x8] sm:$0xff] %v433
      %558 = vst [vmem:[%s194 + $0x10] sm:$0xff] %v438
      %559 = vst [vmem:[%s194 + $0x18] sm:$0xff] %v441
      %560 = vst [vmem:[%s194 + $0x20] sm:$0xff] %v446
      %561 = vst [vmem:[%s194 + $0x28] sm:$0xff] %v449
      %562 = vst [vmem:[%s194 + $0x30] sm:$0xff] %v454
      %563 = vst [vmem:[%s194 + $0x38] sm:$0xff] %v457
      %564 = vst [vmem:[%s194 + $0x40] sm:$0xff] %v462
      %565 = vst [vmem:[%s194 + $0x48] sm:$0xff] %v465
      %566 = vst [vmem:[%s194 + $0x50] sm:$0xff] %v470
      %567 = vst [vmem:[%s194 + $0x58] sm:$0xff] %v473
      %568 = vst [vmem:[%s194 + $0x60] sm:$0xff] %v478
      %569 = vst [vmem:[%s194 + $0x68] sm:$0xff] %v481
      %570 = vst [vmem:[%s194 + $0x70] sm:$0xff] %v486
      %571 = vst [vmem:[%s194 + $0x78] sm:$0xff] %v489
      %572 = vst [vmem:[%s194 + $0x80] sm:$0xff] %v494
      %573 = vst [vmem:[%s194 + $0x88] sm:$0xff] %v497
      %574 = vst [vmem:[%s194 + $0x90] sm:$0xff] %v502
      %575 = vst [vmem:[%s194 + $0x98] sm:$0xff] %v505
      %576 = vst [vmem:[%s194 + $0xa0] sm:$0xff] %v510
      %577 = vst [vmem:[%s194 + $0xa8] sm:$0xff] %v513
      %578 = vst [vmem:[%s194 + $0xb0] sm:$0xff] %v518
      %579 = vst [vmem:[%s194 + $0xb8] sm:$0xff] %v521
      %580 = vst [vmem:[%s194 + $0xc0] sm:$0xff] %v526
      %581 = vst [vmem:[%s194 + $0xc8] sm:$0xff] %v529
      %582 = vst [vmem:[%s194 + $0xd0] sm:$0xff] %v534
      %583 = vst [vmem:[%s194 + $0xd8] sm:$0xff] %v537
      %584 = vst [vmem:[%s194 + $0xe0] sm:$0xff] %v542
      %585 = vst [vmem:[%s194 + $0xe8] sm:$0xff] %v545
      %586 = vst [vmem:[%s194 + $0xf0] sm:$0xff] %v550
      %587 = vst [vmem:[%s194 + $0xf8] sm:$0xff] %v553
      %s588 = smul.u32 32, %s14
      %p589 = scmp.lt.s32.totalorder %s588, 255
      %s590 = scalar_select %p589, %s588, 255
      %s591 = smul.addr %s590, 8
      %s592 = scalar_lea.vmem %s3, %s591
      // Predicated region
      $region33: #{gcn_forward_batched.1} parent=31 // pred_check
        %p593 = pneg %p105
      $region34: #{gcn_forward_batched.1} parent=31 // pred_check_branch
        %595 = sbr.rel (%p593) target = $region36
      $region35: #{gcn_forward_batched.1} parent=31 // pred_region
        %s596 = smul.u32 32, %s14
      $region36: #{gcn_forward_batched.1} parent=31 // pred_fallthru
        _
    $region32: #{gcn_forward_batched.1} parent=5 // pred_fallthru
      _
    %p597 = scmp.le.s32.totalorder 2, %s9
    // Predicated region
    $region37: #{gcn_forward_batched.1} parent=5 // pred_check
      %p598 = pneg %p597
    $region38: #{gcn_forward_batched.1} parent=5 // pred_check_branch
      %600 = sbr.rel (%p598) target = $region40
    $region39: #{gcn_forward_batched.1} parent=5 // pred_region
      %s601 = ssub.s32 %s9, 2
      // Predicated region
      $region41: #{gcn_forward_batched.1} parent=39 // pred_check
        %p602 = pneg %p111
      $region42: #{gcn_forward_batched.1} parent=39 // pred_check_branch
        %604 = sbr.rel (%p602) target = $region44
      $region43: #{gcn_forward_batched.1} parent=39 // pred_region
        %s605 = smul.u32 32, %s15
        %p606 = scmp.lt.s32.totalorder %s605, 255
        %s607 = scalar_select %p606, %s605, 255
        %s608 = smul.addr %s607, 8
        %s609 = scalar_lea.vmem %s3, %s608
      $region44: #{gcn_forward_batched.1} parent=39 // pred_fallthru
        _
    $region40: #{gcn_forward_batched.1} parent=5 // pred_fallthru
      _
  $region6: #{gcn_forward_batched.1} parent=0 // loop_footer
    %s13 = sadd.s32 1, %s9
  $region7: #{gcn_forward_batched.1} parent=0 // loop_footer_branch
    %8 = sbr.rel target = $region3
  $region8: #{gcn_forward_batched.1} parent=0 // loop_exit
    _

</llo_original>
